<compile_context>
chip_gen: v6e
topology: v6e:2x2x1
jax: 0.10.0
libtpu: 0.0.40
codegen_flags: <defaults>
</compile_context>

<pallas_src>
import functools

import jax
import jax.numpy as jnp
import numpy as np
from jax import lax
from jax.experimental import pallas as pl
from jax.experimental.pallas import tpu as pltpu


def _pconv3_kernel(x_ref, w_ref, m_ref, *rest, tile_rows, width, n_row_tiles):
    """One (batch, row-tile) step of the 3x3 'same' conv over the conv channels.

    x_ref : (1, C1p, L)        H-padded, spatially flattened image with one
                               slack element at each end, L = (H+2)*W + 2.
    w_ref : (C1p, 9*C1p)       weights, column order (kh*3 + kw)*C1p + c_in.
    m_ref : (2, tile_rows*W)   {0,1} masks killing the row-wrap contributions
                               of the kw=0 / kw=2 taps at w==0 / w==W-1.
    rest  : (..., o_ref)       o_ref is the last ref: (1, C1p_or_C1, tile_rows*W).
                               (An unused pass-through HBM ref may precede it
                               when the wrapper aliases the full input to the
                               output.)
    """
    o_ref = rest[-1]
    tw = tile_rows * width
    win = tw + 2 * width + 2           # rows [r0, r0 + tile_rows + 2) of the padded image

    if n_row_tiles == 1:
        window = x_ref[0]                                     # (C1p, L) == (C1p, win)
    else:
        # tw is a multiple of 128 whenever n_row_tiles > 1 (see _pick_tile_rows).
        start = pl.multiple_of(pl.program_id(1) * tw, 128)
        window = x_ref[0, :, pl.ds(start, win)]               # (C1p, win)

    masks = m_ref[...]                                        # (2, tw)

    slabs = []
    for kh in range(3):
        for kw in range(3):
            off = kh * width + kw
            s = window[:, off:off + tw]                       # (C1p, tw) contiguous lanes
            if kw == 0:
                s = s * masks[0:1, :]
            elif kw == 2:
                s = s * masks[1:2, :]
            slabs.append(s)

    patches = jnp.concatenate(slabs, axis=0)                  # (9*C1p, tw)
    acc = jnp.dot(w_ref[...], patches,
                  preferred_element_type=jnp.float32)         # single MXU matmul, K = 9*C1p
    o_ref[0] = acc.astype(o_ref.dtype)


def _pick_tile_rows(H, W, c1p, max_rows=None, acc_budget_elems=64 * 1024):
    """Largest row tile that divides H, obeys the BlockSpec lane rule
    (tile_rows*W % 128 == 0 unless tile_rows == H) and keeps the f32
    accumulator around the vreg-file size."""
    legal = [t for t in range(1, H + 1)
             if H % t == 0 and (t == H or (t * W) % 128 == 0)]
    if max_rows is not None:
        capped = [t for t in legal if t <= max_rows]
        legal = capped or legal
    within = [t for t in legal if t * W * c1p <= acc_budget_elems]
    return max(within) if within else min(legal)


def partial_conv3(x, w, n_div, *, compute_dtype=jnp.bfloat16, max_rows_per_tile=None):
    """Forward pass of Partial_conv3.

    x : (N, C, H, W)   input, PyTorch NCHW convention
    w : (C1, C1, 3, 3) conv weight, PyTorch OIHW convention, C1 = C // n_div
    """
    N, C, H, W = x.shape
    c1 = C // n_div                       # integer division, same as PyTorch
    assert w.shape == (c1, c1, 3, 3), w.shape

    # Pad the conv channel count to a multiple of 8 so every in-kernel sublane
    # access / concatenate is aligned. Padded channels carry zero weights.
    c1p = -(-c1 // 8) * 8
    pad_c = c1p - c1

    tile_rows = _pick_tile_rows(H, W, c1p, max_rows_per_tile)
    n_row_tiles = H // tile_rows
    assert tile_rows * n_row_tiles == H
    tw = tile_rows * W
    hw = H * W
    L = (H + 2) * W + 2

    # ---- conv-slice prep (touches only the C1 conv channels): cast, H-pad,
    # flatten the spatial dims, add one slack element at each end. ----------
    x1 = x[:, :c1]
    if pad_c:
        x1 = jnp.pad(x1, ((0, 0), (0, pad_c), (0, 0), (0, 0)))
    x1 = x1.astype(compute_dtype)
    # TODO(synk): this H-pad + flatten is one extra HBM pass over the conv
    # slice; it could be folded into the kernel with manual DMAs + in-VMEM
    # zeroing if it ever shows up in profiles.
    x1 = jnp.pad(x1, ((0, 0), (0, 0), (1, 1), (0, 0)))
    xf = jnp.pad(x1.reshape(N, c1p, (H + 2) * W), ((0, 0), (0, 0), (1, 1)))

    # Weights: OIHW -> (C1p, 9*C1p), column order (kh*3 + kw)*C1p + c_in.
    wp = w
    if pad_c:
        wp = jnp.pad(wp, ((0, pad_c), (0, pad_c), (0, 0), (0, 0)))
    wmat = jnp.transpose(wp.astype(compute_dtype), (0, 2, 3, 1)).reshape(c1p, 9 * c1p)

    # Masks that zero the row-wrap reads of the kw=0 tap at w==0 and the kw=2
    # tap at w==W-1 (the H halo is handled by the zero pad rows).
    col = np.arange(tw) % W
    edge = np.stack([col != 0, col != W - 1]).astype(np.float32)
    edge_mask = jnp.asarray(edge, dtype=compute_dtype)          # (2, tw)

    kernel = functools.partial(
        _pconv3_kernel, tile_rows=tile_rows, width=W, n_row_tiles=n_row_tiles)

    in_specs = [
        pl.BlockSpec((1, c1p, L), lambda n, i: (n, 0, 0)),      # image: resident per n
        pl.BlockSpec((c1p, 9 * c1p), lambda n, i: (0, 0)),      # weights: fetched once
        pl.BlockSpec((2, tw), lambda n, i: (0, 0)),             # masks:   fetched once
    ]

    cbytes = jnp.dtype(compute_dtype).itemsize
    obytes = jnp.dtype(x.dtype).itemsize
    flops = 2 * N * H * W * 9 * c1p * c1p
    bytes_accessed = (N * c1p * L * cbytes + c1p * 9 * c1p * cbytes
                      + 2 * tw * cbytes + N * c1p * hw * obytes)
    cost = pl.CostEstimate(flops=flops, transcendentals=0,
                           bytes_accessed=bytes_accessed)

    vmem_est = (2 * c1p * L * cbytes            # double-buffered image block
                + c1p * 9 * c1p * cbytes        # weights
                + 2 * 2 * tw * cbytes           # masks
                + 2 * c1p * tw * obytes         # double-buffered output tile
                + 10 * c1p * tw * cbytes        # tap slabs + im2col matrix
                + 2 * c1p * tw * 4)             # f32 accumulator slack
    vmem_limit = int(min(max(4 * vmem_est, 16 << 20), 48 << 20))

    compiler_params = pltpu.CompilerParams(
        dimension_semantics=("parallel", "parallel"),
        vmem_limit_bytes=vmem_limit)

    if c1 % 8 == 0:
        # Write the conv result straight into a full-(N, C, H*W) output that
        # aliases x: the untouched channels [c1, C) are never copied by this
        # op (XLA only inserts a copy of x if the caller cannot donate it).
        x_flat = x.reshape(N, C, hw)
        out = pl.pallas_call(
            kernel,
            out_shape=jax.ShapeDtypeStruct((N, C, hw), x.dtype),
            grid_spec=pltpu.PrefetchScalarGridSpec(
                num_scalar_prefetch=0,
                grid=(N, n_row_tiles),
                in_specs=in_specs + [pl.BlockSpec(memory_space=pl.ANY)],
                out_specs=pl.BlockSpec((1, c1, tw), lambda n, i: (n, 0, i)),
            ),
            input_output_aliases={3: 0},
            compiler_params=compiler_params,
            cost_estimate=cost,
        )(xf, wmat, edge_mask, x_flat)
        return out.reshape(N, C, H, W)

    # Fallback (c1 not a multiple of 8): compute the channel-padded conv slice
    # and concatenate with the untouched channels.
    y = pl.pallas_call(
        kernel,
        out_shape=jax.ShapeDtypeStruct((N, c1p, hw), x.dtype),
        grid_spec=pltpu.PrefetchScalarGridSpec(
            num_scalar_prefetch=0,
            grid=(N, n_row_tiles),
            in_specs=in_specs,
            out_specs=pl.BlockSpec((1, c1p, tw), lambda n, i: (n, 0, i)),
        ),
        compiler_params=compiler_params,
        cost_estimate=cost,
    )(xf, wmat, edge_mask)
    y = y[:, :c1].reshape(N, c1, H, W)
    return jnp.concatenate([y, x[:, c1:]], axis=1)


def _reference(x, w, n_div):
    c1 = x.shape[1] // n_div
    y1 = lax.conv_general_dilated(
        x[:, :c1].astype(jnp.float32), w.astype(jnp.float32),
        window_strides=(1, 1), padding=((1, 1), (1, 1)),
        dimension_numbers=("NCHW", "OIHW", "NCHW"))
    return jnp.concatenate([y1.astype(x.dtype), x[:, c1:]], axis=1)


if __name__ == "__main__":

    def run_case(key, *, N, dim, n_div, H, W, compute_dtype, max_rows, tol):
        kx, kw = jax.random.split(key)
        c1 = dim // n_div
        x = jax.random.normal(kx, (N, dim, H, W), dtype=jnp.float32)
        w = jax.random.normal(kw, (c1, c1, 3, 3), dtype=jnp.float32) * 0.1
        fn = jax.jit(functools.partial(
            partial_conv3, n_div=n_div, compute_dtype=compute_dtype,
            max_rows_per_tile=max_rows))
        out = jax.block_until_ready(fn(x, w))
        ref = _reference(x, w, n_div)
        assert out.shape == x.shape
        err = float(jnp.max(jnp.abs(out - ref)))
        assert bool(jnp.allclose(out, ref, atol=tol, rtol=tol)), f"max err {err}"
        assert bool(jnp.array_equal(out[:, c1:], x[:, c1:]))

    k1, k2 = jax.random.split(jax.random.PRNGKey(0))
    # Case 1: c1 = 8 -> aliased pass-through path, bf16 compute, 2 row tiles.
    run_case(k1, N=2, dim=32, n_div=4, H=16, W=16,
             compute_dtype=jnp.bfloat16, max_rows=8, tol=5e-2)
    # Case 2: c1 = 2 (padded to 8) -> concat fallback path, f32 compute.
    run_case(k2, N=2, dim=4, n_div=2, H=16, W=16,
             compute_dtype=jnp.float32, max_rows=8, tol=1e-4)
    print("KERNEL_OK")
</pallas_src>

<mosaic_0001>
module attributes {stable_mosaic.version = 11 : i64} {
  func.func @_pconv3_kernel(%arg0: i32, %arg1: i32, %arg2: memref<1x8x290xbf16, #tpu.memory_space<vmem>>, %arg3: memref<8x72xbf16, #tpu.memory_space<vmem>>, %arg4: memref<2x128xbf16, #tpu.memory_space<vmem>>, %arg5: memref<2x32x256xf32, #tpu.memory_space<any>>, %arg6: memref<1x8x128xf32, #tpu.memory_space<vmem>>) attributes {dimension_semantics = [#tpu.dimension_semantics<parallel>, #tpu.dimension_semantics<parallel>], iteration_bounds = array<i64: 2, 2>, scalar_prefetch = 0 : i64, scratch_operands = 0 : i64, tpu.core_type = #tpu.core_type<tc>, window_params = [{transform_indices = @transform_0, window_bounds = array<i64: 1, 8, 290>}, {pipeline_mode = #tpu.pipeline_mode<synchronous>, transform_indices = @transform_1, window_bounds = array<i64: 8, 72>}, {pipeline_mode = #tpu.pipeline_mode<synchronous>, transform_indices = @transform_2, window_bounds = array<i64: 2, 128>}, {}, {transform_indices = @transform_4, window_bounds = array<i64: 1, 8, 128>}]} {
    %c128_i32 = arith.constant 128 : i32
    %0 = arith.muli %arg1, %c128_i32 : i32
    %1 = tpu.assume_multiple %0, 128 : i32
    %c0 = arith.constant 0 : index
    %c0_0 = arith.constant 0 : index
    %2 = arith.index_cast %1 : i32 to index
    %3 = vector.load %arg2[%c0, %c0_0, %2] : memref<1x8x290xbf16, #tpu.memory_space<vmem>>, vector<1x8x162xbf16>
    %4 = vector.shape_cast %3 : vector<1x8x162xbf16> to vector<8x162xbf16>
    %c0_1 = arith.constant 0 : index
    %c0_2 = arith.constant 0 : index
    %5 = vector.load %arg4[%c0_1, %c0_2] : memref<2x128xbf16, #tpu.memory_space<vmem>>, vector<2x128xbf16>
    %6 = vector.extract_strided_slice %4 {offsets = [0, 0], sizes = [8, 128], strides = [1, 1]} : vector<8x162xbf16> to vector<8x128xbf16>
    %7 = vector.extract_strided_slice %5 {offsets = [0, 0], sizes = [1, 128], strides = [1, 1]} : vector<2x128xbf16> to vector<1x128xbf16>
    %8 = vector.broadcast %7 : vector<1x128xbf16> to vector<8x128xbf16>
    %9 = arith.mulf %6, %8 : vector<8x128xbf16>
    %10 = vector.extract_strided_slice %4 {offsets = [0, 1], sizes = [8, 128], strides = [1, 1]} : vector<8x162xbf16> to vector<8x128xbf16>
    %11 = vector.extract_strided_slice %4 {offsets = [0, 2], sizes = [8, 128], strides = [1, 1]} : vector<8x162xbf16> to vector<8x128xbf16>
    %12 = vector.extract_strided_slice %5 {offsets = [1, 0], sizes = [1, 128], strides = [1, 1]} : vector<2x128xbf16> to vector<1x128xbf16>
    %13 = vector.broadcast %12 : vector<1x128xbf16> to vector<8x128xbf16>
    %14 = arith.mulf %11, %13 : vector<8x128xbf16>
    %15 = vector.extract_strided_slice %4 {offsets = [0, 16], sizes = [8, 128], strides = [1, 1]} : vector<8x162xbf16> to vector<8x128xbf16>
    %16 = vector.extract_strided_slice %5 {offsets = [0, 0], sizes = [1, 128], strides = [1, 1]} : vector<2x128xbf16> to vector<1x128xbf16>
    %17 = vector.broadcast %16 : vector<1x128xbf16> to vector<8x128xbf16>
    %18 = arith.mulf %15, %17 : vector<8x128xbf16>
    %19 = vector.extract_strided_slice %4 {offsets = [0, 17], sizes = [8, 128], strides = [1, 1]} : vector<8x162xbf16> to vector<8x128xbf16>
    %20 = vector.extract_strided_slice %4 {offsets = [0, 18], sizes = [8, 128], strides = [1, 1]} : vector<8x162xbf16> to vector<8x128xbf16>
    %21 = vector.extract_strided_slice %5 {offsets = [1, 0], sizes = [1, 128], strides = [1, 1]} : vector<2x128xbf16> to vector<1x128xbf16>
    %22 = vector.broadcast %21 : vector<1x128xbf16> to vector<8x128xbf16>
    %23 = arith.mulf %20, %22 : vector<8x128xbf16>
    %24 = vector.extract_strided_slice %4 {offsets = [0, 32], sizes = [8, 128], strides = [1, 1]} : vector<8x162xbf16> to vector<8x128xbf16>
    %25 = vector.extract_strided_slice %5 {offsets = [0, 0], sizes = [1, 128], strides = [1, 1]} : vector<2x128xbf16> to vector<1x128xbf16>
    %26 = vector.broadcast %25 : vector<1x128xbf16> to vector<8x128xbf16>
    %27 = arith.mulf %24, %26 : vector<8x128xbf16>
    %28 = vector.extract_strided_slice %4 {offsets = [0, 33], sizes = [8, 128], strides = [1, 1]} : vector<8x162xbf16> to vector<8x128xbf16>
    %29 = vector.extract_strided_slice %4 {offsets = [0, 34], sizes = [8, 128], strides = [1, 1]} : vector<8x162xbf16> to vector<8x128xbf16>
    %30 = vector.extract_strided_slice %5 {offsets = [1, 0], sizes = [1, 128], strides = [1, 1]} : vector<2x128xbf16> to vector<1x128xbf16>
    %31 = vector.broadcast %30 : vector<1x128xbf16> to vector<8x128xbf16>
    %32 = arith.mulf %29, %31 : vector<8x128xbf16>
    %33 = tpu.concatenate %9, %10, %14, %18, %19, %23, %27, %28, %32 in 0 : vector<8x128xbf16>, vector<8x128xbf16>, vector<8x128xbf16>, vector<8x128xbf16>, vector<8x128xbf16>, vector<8x128xbf16>, vector<8x128xbf16>, vector<8x128xbf16>, vector<8x128xbf16> -> vector<72x128xbf16>
    %c0_3 = arith.constant 0 : index
    %c0_4 = arith.constant 0 : index
    %34 = vector.load %arg3[%c0_3, %c0_4] : memref<8x72xbf16, #tpu.memory_space<vmem>>, vector<8x72xbf16>
    %cst = arith.constant dense<0.000000e+00> : vector<8x128xf32>
    %35 = tpu.matmul %34, %33, %cst {dimension_numbers = #tpu.dot_dimension_numbers<[1], [0], [0], [1], [0, 0, 1, 1], [], []>} : vector<8x72xbf16>, vector<72x128xbf16>, vector<8x128xf32> -> vector<8x128xf32>
    %c0_5 = arith.constant 0 : index
    %c0_6 = arith.constant 0 : index
    %c0_7 = arith.constant 0 : index
    %36 = vector.load %arg6[%c0_5, %c0_6, %c0_7] : memref<1x8x128xf32, #tpu.memory_space<vmem>>, vector<1x8x128xf32>
    %37 = vector.shape_cast %36 : vector<1x8x128xf32> to vector<8x128xf32>
    %38 = vector.shape_cast %35 : vector<8x128xf32> to vector<1x8x128xf32>
    tpu.vector_store %arg6[%c0_5, %c0_6, %c0_7], %38 {strides = array<i32>} : memref<1x8x128xf32, #tpu.memory_space<vmem>>, vector<1x8x128xf32>,
    return
  }
  func.func @transform_0(%arg0: i32, %arg1: i32) -> (i32, i32, i32) {
    %c0_i32 = arith.constant 0 : i32
    %c0_i32_0 = arith.constant 0 : i32
    %c0_i32_1 = arith.constant 0 : i32
    return %arg0, %c0_i32, %c0_i32_0 : i32, i32, i32
  }
  func.func @transform_1(%arg0: i32, %arg1: i32) -> (i32, i32) {
    %c0_i32 = arith.constant 0 : i32
    %c0_i32_0 = arith.constant 0 : i32
    %c0_i32_1 = arith.constant 0 : i32
    return %c0_i32, %c0_i32_0 : i32, i32
  }
  func.func @transform_2(%arg0: i32, %arg1: i32) -> (i32, i32) {
    %c0_i32 = arith.constant 0 : i32
    %c0_i32_0 = arith.constant 0 : i32
    %c0_i32_1 = arith.constant 0 : i32
    return %c0_i32, %c0_i32_0 : i32, i32
  }
  func.func @transform_4(%arg0: i32, %arg1: i32) -> (i32, i32, i32) {
    %c0_i32 = arith.constant 0 : i32
    %c0_i32_0 = arith.constant 0 : i32
    return %arg0, %c0_i32, %arg1 : i32, i32, i32
  }
}

</mosaic_0001>

<llo_original>
// kernel: partial_conv3.1
$region0: #{partial_conv3.1}
  #allocation0 [shape = 'u32[]', space=smem, size = 0x4, offset = 0x4, fixed_abs, tag = 'smem constant byte address 0x4 - core index']
  #allocation1 [shape = 'u32[144,128]{1,0:T(1,128)}', space=vmem, size = 0x12000, scoped, tag = 'internal scratch']
  %s0 = inlined_call_operand.vmem [shape: bf16[2,8,290], index: 0, kind: input, shape index: {}]
  %s1 = inlined_call_operand.vmem [shape: bf16[8,72], index: 1, kind: input, shape index: {}]
  %s2 = inlined_call_operand.vmem [shape: bf16[2,128], index: 2, kind: input, shape index: {}]
  %s3 = inlined_call_operand.vmem [shape: f32[2,32,256], index: 3, kind: input, shape index: {}, may-alias: {3,4}]
  %s4 = inlined_call_operand.vmem [shape: f32[2,32,256], index: 4, kind: output, shape index: {}, may-alias: {3,4}]
  %s5 = sld [smem:[#allocation0]]
  $region45: #{partial_conv3.1} parent=0
    _
  %s7 = ssub.s32 1, %s5
  %s8 = scalar_select 0, %s7, %s5
  loop: start=0, step=1, limit=6
  $region2: #{partial_conv3.1} parent=0 // loop_pre_header
    _
  $region3: #{partial_conv3.1} parent=0 // loop_header
    %s10 = sphi 0, %s14
    %p11 = scmp.ge.s32.totalorder %s10, 6
    %s17 = sphi 0, %s29
    %s18 = sphi 0, %s25
    %s19 = sphi 0, %s17
    %s20 = sphi 0, %s18
    %s21 = sphi 0, %s19
    %s22 = sphi 0, %s20
    %s32 = sphi 0, %s34
    %s35 = sphi 0, %s32
    %s36 = sphi 0, %s35
    %s52 = sphi 0, %s36
    %s56 = sphi 0, %s56
    %s58 = sphi 0, %s56
    %s59 = sphi 0, %s58
    %s73 = sphi 0, %s59
    %s77 = sphi 0, %s77
    %s79 = sphi 0, %s77
    %s80 = sphi 0, %s79
    %s94 = sphi 0, %s80
    %s102 = sphi 0, %s104
    %s105 = sphi 0, %s102
    %s106 = sphi 0, %s105
    %s122 = sphi 0, %s106
  $region4: #{partial_conv3.1} parent=0 // loop_header_branch
    %13 = sbr.rel (%p11) target = $region8
  $region5: #{partial_conv3.1} parent=0 // loop_body
    %s15 = ssub.s32 %s10, 1
    %s16 = ssub.s32 %s10, 2
    %s23 = sadd.s32 1, %s18
    %p24 = scmp.ge.s32.totalorder %s23, 2
    %s25 = scalar_select %p24, 0, %s23
    %s26 = sadd.s32 1, %s17
    %s27 = scalar_select %p24, %s26, %s17
    %p28 = scmp.ge.s32.totalorder %s27, 2
    %s29 = scalar_select %p28, 0, %s27
    %s30 = ssub.s32 %s17, %s29
    %p31 = scmp.eq.s32.totalorder %s30, 0
    %s33 = sadd.s32 %s32, 1
    %s34 = scalar_select %p31, %s32, %s33
    %p37 = pneg %p31
    %p38 = scmp.eq.s32.totalorder %s10, 3
    %p39 = por %p37, %p38
    %p40 = scmp.ne.s32.totalorder %s32, %s35
    %p41 = scmp.eq.s32.totalorder %s10, 0
    %p42 = por %p40, %p41
    %p43 = scmp.ne.s32.totalorder %s32, %s35
    %p44 = scmp.eq.s32.totalorder %s15, 3
    %p45 = por %p43, %p44
    %p46 = scmp.ne.s32.totalorder %s35, %s36
    %p47 = scmp.eq.s32.totalorder %s15, 0
    %p48 = por %p46, %p47
    %p49 = scmp.ne.s32.totalorder %s35, %s36
    %p50 = scmp.eq.s32.totalorder %s16, 3
    %p51 = por %p49, %p50
    %p53 = scmp.ne.s32.totalorder %s36, %s52
    %p54 = scmp.eq.s32.totalorder %s16, 0
    %p55 = por %p53, %p54
    %s57 = sadd.s32 %s56, 1
    %p60 = scmp.eq.s32.totalorder %s10, 3
    %p61 = scmp.ne.s32.totalorder %s56, %s58
    %p62 = scmp.eq.s32.totalorder %s10, 0
    %p63 = por %p61, %p62
    %p64 = scmp.ne.s32.totalorder %s56, %s58
    %p65 = scmp.eq.s32.totalorder %s15, 3
    %p66 = por %p64, %p65
    %p67 = scmp.ne.s32.totalorder %s58, %s59
    %p68 = scmp.eq.s32.totalorder %s15, 0
    %p69 = por %p67, %p68
    %p70 = scmp.ne.s32.totalorder %s58, %s59
    %p71 = scmp.eq.s32.totalorder %s16, 3
    %p72 = por %p70, %p71
    %p74 = scmp.ne.s32.totalorder %s59, %s73
    %p75 = scmp.eq.s32.totalorder %s16, 0
    %p76 = por %p74, %p75
    %s78 = sadd.s32 %s77, 1
    %p81 = scmp.eq.s32.totalorder %s10, 3
    %p82 = scmp.ne.s32.totalorder %s77, %s79
    %p83 = scmp.eq.s32.totalorder %s10, 0
    %p84 = por %p82, %p83
    %p85 = scmp.ne.s32.totalorder %s77, %s79
    %p86 = scmp.eq.s32.totalorder %s15, 3
    %p87 = por %p85, %p86
    %p88 = scmp.ne.s32.totalorder %s79, %s80
    %p89 = scmp.eq.s32.totalorder %s15, 0
    %p90 = por %p88, %p89
    %p91 = scmp.ne.s32.totalorder %s79, %s80
    %p92 = scmp.eq.s32.totalorder %s16, 3
    %p93 = por %p91, %p92
    %p95 = scmp.ne.s32.totalorder %s80, %s94
    %p96 = scmp.eq.s32.totalorder %s16, 0
    %p97 = por %p95, %p96
    %s98 = ssub.s32 %s17, %s29
    %s99 = ssub.s32 %s18, %s25
    %s100 = sor.u32 %s98, %s99
    %p101 = scmp.eq.s32.totalorder %s100, 0
    %s103 = sadd.s32 %s102, 1
    %s104 = scalar_select %p101, %s102, %s103
    %p107 = pneg %p101
    %p108 = scmp.eq.s32.totalorder %s10, 3
    %p109 = por %p107, %p108
    %p110 = scmp.ne.s32.totalorder %s102, %s105
    %p111 = scmp.eq.s32.totalorder %s10, 0
    %p112 = por %p110, %p111
    %p113 = scmp.ne.s32.totalorder %s102, %s105
    %p114 = scmp.eq.s32.totalorder %s15, 3
    %p115 = por %p113, %p114
    %p116 = scmp.ne.s32.totalorder %s105, %s106
    %p117 = scmp.eq.s32.totalorder %s15, 0
    %p118 = por %p116, %p117
    %p119 = scmp.ne.s32.totalorder %s105, %s106
    %p120 = scmp.eq.s32.totalorder %s16, 3
    %p121 = por %p119, %p120
    %p123 = scmp.ne.s32.totalorder %s106, %s122
    %p124 = scmp.eq.s32.totalorder %s16, 0
    %p125 = por %p123, %p124
    %p126 = scmp.le.s32.totalorder 1, %s10
    %p127 = scmp.lt.s32.totalorder %s10, 5
    %p128 = pnand %p126, %p127
    %p129 = pneg %p128
    // Predicated region
    $region9: #{partial_conv3.1} parent=5 // pred_check
      _
    $region10: #{partial_conv3.1} parent=5 // pred_check_branch
      %131 = sbr.rel (%p128) target = $region12
    $region11: #{partial_conv3.1} parent=5 // pred_region
      %s132 = ssub.s32 %s10, 1
      // Predicated region
      $region13: #{partial_conv3.1} parent=11 // pred_check
        %p133 = pneg %p69
      $region14: #{partial_conv3.1} parent=11 // pred_check_branch
        %135 = sbr.rel (%p133) target = $region16
      $region15: #{partial_conv3.1} parent=11 // pred_region
        _
      $region16: #{partial_conv3.1} parent=11 // pred_fallthru
        _
      // Predicated region
      $region17: #{partial_conv3.1} parent=11 // pred_check
        %p136 = pneg %p90
      $region18: #{partial_conv3.1} parent=11 // pred_check_branch
        %138 = sbr.rel (%p136) target = $region20
      $region19: #{partial_conv3.1} parent=11 // pred_region
        _
      $region20: #{partial_conv3.1} parent=11 // pred_fallthru
        _
    $region12: #{partial_conv3.1} parent=5 // pred_fallthru
      _
    %p139 = scmp.lt.s32.totalorder %s10, 4
    // Predicated region
    $region21: #{partial_conv3.1} parent=5 // pred_check
      %p140 = pneg %p139
    $region22: #{partial_conv3.1} parent=5 // pred_check_branch
      %142 = sbr.rel (%p140) target = $region24
    $region23: #{partial_conv3.1} parent=5 // pred_region
      // Predicated region
      $region25: #{partial_conv3.1} parent=23 // pred_check
        %p143 = pneg %p42
      $region26: #{partial_conv3.1} parent=23 // pred_check_branch
        %145 = sbr.rel (%p143) target = $region28
      $region27: #{partial_conv3.1} parent=23 // pred_region
        %p146 = scmp.lt.s32.totalorder %s17, 1
        %s147 = scalar_select %p146, %s17, 1
        %s148 = smul.addr %s147, 3
        %s149 = smul.addr %s148, 4
        %s150 = scalar_lea.vmem %s0, %s149
      $region28: #{partial_conv3.1} parent=23 // pred_fallthru
        _
    $region24: #{partial_conv3.1} parent=5 // pred_fallthru
      _
    %p151 = scmp.le.s32.totalorder 1, %s10
    %p152 = scmp.lt.s32.totalorder %s10, 5
    %p153 = pnand %p151, %p152
    %p154 = pneg %p153
    // Predicated region
    $region29: #{partial_conv3.1} parent=5 // pred_check
      _
    $region30: #{partial_conv3.1} parent=5 // pred_check_branch
      %156 = sbr.rel (%p153) target = $region32
    $region31: #{partial_conv3.1} parent=5 // pred_region
      %s157 = ssub.s32 %s10, 1
      %p158 = scmp.lt.s32.totalorder %s19, 1
      %s159 = scalar_select %p158, %s19, 1
      %s160 = smul.addr %s159, 3
      %s161 = smul.addr %s160, 4
      %s162 = scalar_lea.vmem %s0, %s161
      %p163 = pneg %p48
      %p164 = pneg %p45
      %p165 = pneg %p69
      %p166 = pneg %p66
      %p167 = pneg %p90
      %p168 = pneg %p87
      %p169 = pneg %p118
      %p170 = pneg %p115
      %p171 = scmp.lt.s32.totalorder %s19, 1
      %s172 = scalar_select %p171, %s19, 1
      %p173 = scmp.lt.s32.totalorder %s20, 1
      %s174 = scalar_select %p173, %s20, 1
      %s175 = smul.addr %s172, 8
      %s176 = sadd.s32 %s174, %s175
      %s177 = smul.addr %s176, 8
      %s178 = scalar_lea.vmem %s4, %s177
      %p179 = scmp.lt.s32.totalorder %s19, 1
      %s180 = scalar_select %p179, %s19, 1
      %s181 = smul.addr %s180, 3
      %s182 = smul.addr %s181, 4
      %s183 = scalar_lea.vmem %s0, %s182
      %p184 = scmp.lt.s32.totalorder %s19, 1
      %s185 = scalar_select %p184, %s19, 1
      %p186 = scmp.lt.s32.totalorder %s20, 1
      %s187 = scalar_select %p186, %s20, 1
      %s188 = smul.addr %s185, 8
      %s189 = sadd.s32 %s187, %s188
      %s190 = smul.addr %s189, 8
      %s191 = scalar_lea.vmem %s4, %s190
      %s193 = smul.u32 %s20, 128
      %s194 = sshra.s32 %s193, 7
      %s195 = sand.u32 %s193, 127
      %s196 = smul.addr %s194, 4
      %s197 = scalar_lea.vmem %s183, %s196
      %v198 = vld [vmem:[%s197] sm:$0xff]
      %v199 = vld [vmem:[%s2] sm:$0x1]
      %v201 = vpack.i.b16 %v199, %v199
      %v203 = vlaneseq
      %v204 = vshrl.u32 %v203, 7
      %v205 = vsub.s32 0, %v204
      %v206 = vrot.slane %v201, %v205
      %v207 = vmul.bf16 %v198, %v206
      %v208 = vshrl.u32 %v199, 16
      %v209 = vpack.i.b16 %v208, %v208
      %v211 = vlaneseq
      %v212 = vshrl.u32 %v211, 7
      %v213 = vsub.s32 0, %v212
      %v214 = vrot.slane %v209, %v213
      %v216 = vunpack.c.l.b16 %v214
      %v217 = vpack.c.b16 %v216, %v216
      %218 = vrot.lane.b32.xlu0 %v217, 2
      %v219 = vpop.permute.xlu0 %218
      %v220 = vrot.slane %v219, 4
      %vm221 = vcmask 15360
      %v222 = vsel %vm221, %v220, %v219
      %v224 = vmul.bf16 %v198, %v222
      %v226 = vunpack.c.l.b16 %v206
      %v227 = vpack.c.b16 %v226, %v226
      %228 = vrot.lane.b32.xlu0 %v227, 16
      %v229 = vpop.permute.xlu0 %228
      %v230 = vrot.slane %v229, 4
      %vm231 = vcmask 130048
      %v232 = vsel %vm231, %v230, %v229
      %v234 = vmul.bf16 %v198, %v232
      %235 = vrot.lane.b32.xlu0 %v217, 18
      %v236 = vpop.permute.xlu0 %235
      %v237 = vrot.slane %v236, 4
      %vm238 = vcmask 146432
      %v239 = vsel %vm238, %v237, %v236
      %v241 = vmul.bf16 %v198, %v239
      %242 = vrot.lane.b32.xlu0 %v227, 32
      %v243 = vpop.permute.xlu0 %242
      %v244 = vrot.slane %v243, 4
      %vm245 = vcmask 261120
      %v246 = vsel %vm245, %v244, %v243
      %v248 = vmul.bf16 %v198, %v246
      %249 = vrot.lane.b32.xlu0 %v217, 34
      %v250 = vpop.permute.xlu0 %249
      %v251 = vrot.slane %v250, 4
      %vm252 = vcmask 277504
      %v253 = vsel %vm252, %v251, %v250
      %v255 = vmul.bf16 %v198, %v253
      %v257 = vunpack.c.l.b16 %v198
      %v258 = vunpack.c.h.b16 %v198
      %v259 = vpack.c.b16 %v257, %v257
      %v260 = vpack.c.b16 %v258, %v258
      %261 = vrot.lane.b32.xlu0 %v259, 127
      %v262 = vpop.permute.xlu0 %261
      %263 = vrot.lane.b32.xlu0 %v260, 127
      %v264 = vpop.permute.xlu0 %263
      %vm265 = vcmask 1039360
      %v266 = vsel %vm265, %v262, %v264
      %v268 = vunpack.c.l.b16 %v224
      %v269 = vunpack.c.h.b16 %v224
      %v270 = vpack.c.b16 %v268, %v268
      %v271 = vpack.c.b16 %v269, %v269
      %272 = vrot.lane.b32.xlu0 %v270, 126
      %v273 = vpop.permute.xlu0 %272
      %274 = vrot.lane.b32.xlu0 %v271, 126
      %v275 = vpop.permute.xlu0 %274
      %vm276 = vcmask 1031168
      %v277 = vsel %vm276, %v273, %v275
      %v279 = vunpack.c.l.b16 %v234
      %v280 = vunpack.c.h.b16 %v234
      %v281 = vpack.c.b16 %v279, %v279
      %v282 = vpack.c.b16 %v280, %v280
      %283 = vrot.lane.b32.xlu0 %v281, 112
      %v284 = vpop.permute.xlu0 %283
      %285 = vrot.lane.b32.xlu0 %v282, 112
      %v286 = vpop.permute.xlu0 %285
      %vm287 = vcmask 916480
      %v288 = vsel %vm287, %v284, %v286
      %289 = vrot.lane.b32.xlu0 %v259, 111
      %v290 = vpop.permute.xlu0 %289
      %291 = vrot.lane.b32.xlu0 %v260, 111
      %v292 = vpop.permute.xlu0 %291
      %vm293 = vcmask 908288
      %v294 = vsel %vm293, %v290, %v292
      %v296 = vunpack.c.l.b16 %v241
      %v297 = vunpack.c.h.b16 %v241
      %v298 = vpack.c.b16 %v296, %v296
      %v299 = vpack.c.b16 %v297, %v297
      %300 = vrot.lane.b32.xlu0 %v298, 110
      %v301 = vpop.permute.xlu0 %300
      %302 = vrot.lane.b32.xlu0 %v299, 110
      %v303 = vpop.permute.xlu0 %302
      %vm304 = vcmask 900096
      %v305 = vsel %vm304, %v301, %v303
      %v307 = vunpack.c.l.b16 %v248
      %v308 = vunpack.c.h.b16 %v248
      %v309 = vpack.c.b16 %v307, %v307
      %v310 = vpack.c.b16 %v308, %v308
      %311 = vrot.lane.b32.xlu0 %v309, 96
      %v312 = vpop.permute.xlu0 %311
      %313 = vrot.lane.b32.xlu0 %v310, 96
      %v314 = vpop.permute.xlu0 %313
      %vm315 = vcmask 785408
      %v316 = vsel %vm315, %v312, %v314
      %317 = vrot.lane.b32.xlu0 %v259, 95
      %v318 = vpop.permute.xlu0 %317
      %319 = vrot.lane.b32.xlu0 %v260, 95
      %v320 = vpop.permute.xlu0 %319
      %vm321 = vcmask 777216
      %v322 = vsel %vm321, %v318, %v320
      %v324 = vunpack.c.l.b16 %v255
      %v325 = vunpack.c.h.b16 %v255
      %v326 = vpack.c.b16 %v324, %v324
      %v327 = vpack.c.b16 %v325, %v325
      %328 = vrot.lane.b32.xlu0 %v326, 94
      %v329 = vpop.permute.xlu0 %328
      %330 = vrot.lane.b32.xlu0 %v327, 94
      %v331 = vpop.permute.xlu0 %330
      %vm332 = vcmask 769024
      %v333 = vsel %vm332, %v329, %v331
      %vm334 = vcmask 1043456
      %v337 = vsel %vm334, %v207, %v266
      %v341 = vsel %vm334, %v277, %v288
      %v345 = vsel %vm334, %v294, %v305
      %v349 = vsel %vm334, %v316, %v322
      %v351 = vld [vmem:[%s1] sm:$0xf]
      %vm352 = vcmask 588800
      %v354 = vsel %vm352, %v351, 0
      %v357 = vsel %vm334, %v333, 0
      %359 = vmatprep.subr.bf16.mxu0 0
      %360 = vmatpush1.bf16.msra.mxu0 0
      %361 = vmatprep.subr.bf16.mxu0 0
      %362 = vmatpush1.bf16.msra.mxu0 0
      %363 = vmatprep.subr.bf16.mxu0 0
      %364 = vmatpush1.bf16.msra.mxu0 0
      %365 = vmatprep.subr.bf16.mxu0 0
      %366 = vmatpush1.bf16.msra.mxu0 %v357
      %367 = vmatprep.subr.bf16.mxu0 0
      %368 = vmatpush1.bf16.msra.mxu0 %v349
      %369 = vmatprep.subr.bf16.mxu0 0
      %370 = vmatpush1.bf16.msra.mxu0 %v345
      %371 = vmatprep.subr.bf16.mxu0 0
      %372 = vmatpush1.bf16.msra.mxu0 %v341
      %373 = vmatprep.subr.bf16.mxu0 0
      %374 = vmatpush1.bf16.msra.mxu0 %v337
      %375 = vmatprep.subr.bf16.mxu0 0
      %376 = vmatpush2.bf16.msra.mxu0 0
      %377 = vmatprep.subr.bf16.mxu0 0
      %378 = vmatpush2.bf16.msra.mxu0 0
      %379 = vmatprep.subr.bf16.mxu0 0
      %380 = vmatpush2.bf16.msra.mxu0 0
      %381 = vmatprep.subr.bf16.mxu0 0
      %382 = vmatpush2.bf16.msra.mxu0 0
      %383 = vmatprep.subr.bf16.mxu0 0
      %384 = vmatpush2.bf16.msra.mxu0 0
      %385 = vmatprep.subr.bf16.mxu0 0
      %386 = vmatpush2.bf16.msra.mxu0 0
      %387 = vmatprep.subr.bf16.mxu0 0
      %388 = vmatpush2.bf16.msra.mxu0 0
      %389 = vmatprep.subr.bf16.mxu0 0
      %390 = vmatpush2.bf16.msra.mxu0 0
      %391 = vmatprep.mubr.bf16.mxu0 0
      %392 = vmatmul.mubr.bf16.gmra.mxu0 %v354
      %v393 = vpop.f32.mrf.mxu0
      %v394 = vadd.f32 0.0, %v393
      %v395 = vpop.f32.mrf.mxu0
      %v396 = vpop.f32.mrf.mxu0
      %v397 = vpop.f32.mrf.mxu0
      %398 = vdwg.mxu0
      %399 = vst [vmem:[%s191] sm:$0xff] %v394
      %p400 = scmp.lt.s32.totalorder %s19, 1
      %s401 = scalar_select %p400, %s19, 1
      %p402 = scmp.lt.s32.totalorder %s20, 1
      %s403 = scalar_select %p402, %s20, 1
      %s404 = smul.addr %s401, 8
      %s405 = sadd.s32 %s403, %s404
      %s406 = smul.addr %s405, 8
      %s407 = scalar_lea.vmem %s4, %s406
      // Predicated region
      $region33: #{partial_conv3.1} parent=31 // pred_check
        %p408 = pneg %p115
      $region34: #{partial_conv3.1} parent=31 // pred_check_branch
        %410 = sbr.rel (%p408) target = $region36
      $region35: #{partial_conv3.1} parent=31 // pred_region
        _
      $region36: #{partial_conv3.1} parent=31 // pred_fallthru
        _
    $region32: #{partial_conv3.1} parent=5 // pred_fallthru
      _
    %p411 = scmp.le.s32.totalorder 2, %s10
    // Predicated region
    $region37: #{partial_conv3.1} parent=5 // pred_check
      %p412 = pneg %p411
    $region38: #{partial_conv3.1} parent=5 // pred_check_branch
      %414 = sbr.rel (%p412) target = $region40
    $region39: #{partial_conv3.1} parent=5 // pred_region
      %s415 = ssub.s32 %s10, 2
      // Predicated region
      $region41: #{partial_conv3.1} parent=39 // pred_check
        %p416 = pneg %p121
      $region42: #{partial_conv3.1} parent=39 // pred_check_branch
        %418 = sbr.rel (%p416) target = $region44
      $region43: #{partial_conv3.1} parent=39 // pred_region
        %p419 = scmp.lt.s32.totalorder %s21, 1
        %s420 = scalar_select %p419, %s21, 1
        %p421 = scmp.lt.s32.totalorder %s22, 1
        %s422 = scalar_select %p421, %s22, 1
        %s423 = smul.addr %s420, 8
        %s424 = sadd.s32 %s422, %s423
        %s425 = smul.addr %s424, 8
        %s426 = scalar_lea.vmem %s4, %s425
      $region44: #{partial_conv3.1} parent=39 // pred_fallthru
        _
    $region40: #{partial_conv3.1} parent=5 // pred_fallthru
      _
  $region6: #{partial_conv3.1} parent=0 // loop_footer
    %s14 = sadd.s32 1, %s10
  $region7: #{partial_conv3.1} parent=0 // loop_footer_branch
    %9 = sbr.rel target = $region3
  $region8: #{partial_conv3.1} parent=0 // loop_exit
    _

</llo_original>
